<compile_context>
chip_gen: v7x
topology: tpu7x:2x2x1
jax: 0.10.0
libtpu: 0.0.40
codegen_flags: <defaults>
</compile_context>

<pallas_src>
import functools

import jax
import jax.numpy as jnp
from jax.experimental import pallas as pl
from jax.experimental.pallas import tpu as pltpu


def _cdiv(a, b):
    return -(-a // b)


def _round_up(x, m):
    return ((x + m - 1) // m) * m


@functools.lru_cache(maxsize=None)
def _device_kind():
    return jax.devices()[0].device_kind.lower()


def _bf16_tanh_capable():
    # v6e / v7x have a bf16-capable EUP; v5e and older require f32 tanh.
    k = _device_kind()
    return ("v6" in k) or ("v7" in k) or ("tpu7" in k)


def _num_batch_cores():
    # v7x has 2 TensorCores per chip; the parallel batch axis shards across them.
    k = _device_kind()
    return 2 if (("v7" in k) or ("tpu7" in k)) else 1


def _choose_tiling(B, block_b, n_cores):
    """Pick (batch tile, number of tiles) per the perf review:
       - as few, as large tiles as possible (amortize ~600-cycle step overhead),
       - tb a multiple of 128 (lane-dense output store, whole bf16 repack tiles),
       - minimal batch padding (tile sized from ceil(B / n_tiles)),
       - even tile count across TensorCores on v7x for large B."""
    n_tiles = _cdiv(B, block_b)
    if n_cores > 1 and B > 128 * n_cores:
        n_tiles = _round_up(max(n_tiles, n_cores), n_cores)
    tb = max(128, _round_up(_cdiv(B, n_tiles), 128))
    return tb, n_tiles


def _activation(z, bf16_tanh):
    """tanh for the hidden layers; bf16 on v6e/v7x (bf16 EUP), f32 elsewhere.
    Output is bf16 either way so the next matmul hits the MXU bf16 path."""
    if bf16_tanh:
        return jnp.tanh(z.astype(jnp.bfloat16))
    return jnp.tanh(z).astype(jnp.bfloat16)


def dqn_mlp_kernel(
    obs_ref, act_ref, w1o_ref, w1a_ref, b1_ref, w2_ref, b2_ref, w3_ref, b3_ref,
    o_ref, *, bf16_tanh,
):
    # --- layer 1 (fused concat): x@W1 == obs@W1_obs + act@W1_act -------------
    obs_bf = obs_ref[...].astype(jnp.bfloat16)   # no-op if caller passes bf16
    act_bf = act_ref[...].astype(jnp.bfloat16)
    z1 = (
        jnp.dot(obs_bf, w1o_ref[...], preferred_element_type=jnp.float32)
        + jnp.dot(act_bf, w1a_ref[...], preferred_element_type=jnp.float32)
        + b1_ref[...]
    )
    h1 = _activation(z1, bf16_tanh)

    # --- layer 2 --------------------------------------------------------------
    z2 = jnp.dot(h1, w2_ref[...], preferred_element_type=jnp.float32) + b2_ref[...]
    h2 = _activation(z2, bf16_tanh)

    # --- output layer, lane-dense epilogue: (1,H2) . (TB,H2)^T -> (1,TB) ------
    # (Contracting dim-1/dim-1 keeps the result lane-dense; the h2 transpose is
    #  handled by the MXU operand path / XLU, which has slack here.)
    q = jax.lax.dot_general(
        w3_ref[...], h2,
        dimension_numbers=(((1,), (1,)), ((), ())),
        preferred_element_type=jnp.float32,
    )
    q = q + b3_ref[0, 0]                               # scalar bias from SMEM
    o_ref[0] = q.astype(o_ref.dtype)                   # unmasked full-lane store


@functools.partial(jax.jit, static_argnames=("tb", "grid_b", "bf16_tanh"))
def _dqn_forward_impl(obs, act, params, *, tb, grid_b, bf16_tanh):
    w1o, w1a, b1, w2, b2, w3, b3 = params
    B, obs_dim = obs.shape
    act_dim = act.shape[1]
    h1 = w1o.shape[1]
    h2 = w2.shape[1]

    b_pad = grid_b * tb
    if b_pad != B:
        obs = jnp.pad(obs, ((0, b_pad - B), (0, 0)))
        act = jnp.pad(act, ((0, b_pad - B), (0, 0)))

    # Weights / biases stay resident in VMEM across the batch grid
    # (constant index_map -> no per-step re-DMA). Hidden/input dims are left
    # unpadded on purpose: the kernel is not MXU-bound.
    def resident(*shape):
        return pl.BlockSpec(shape, lambda i: (0,) * len(shape))

    out = pl.pallas_call(
        functools.partial(dqn_mlp_kernel, bf16_tanh=bf16_tanh),
        out_shape=jax.ShapeDtypeStruct((grid_b, 1, tb), jnp.float32),
        grid=(grid_b,),
        in_specs=[
            pl.BlockSpec((tb, obs_dim), lambda i: (i, 0)),      # obs tile
            pl.BlockSpec((tb, act_dim), lambda i: (i, 0)),      # act tile
            resident(obs_dim, h1),                              # W1[:obs_dim]
            resident(act_dim, h1),                              # W1[obs_dim:]
            resident(1, h1),                                    # b1
            resident(h1, h2),                                   # W2
            resident(1, h2),                                    # b2
            resident(1, h2),                                    # W3 (row vector)
            pl.BlockSpec(memory_space=pltpu.MemorySpace.SMEM),  # b3 scalar
        ],
        out_specs=pl.BlockSpec((1, 1, tb), lambda i: (i, 0, 0)),
        compiler_params=pltpu.CompilerParams(
            dimension_semantics=("parallel",),   # shards batch tiles across TCs
        ),
    )(obs, act, w1o, w1a, b1, w2, b2, w3, b3)

    # (grid_b, 1, tb) is contiguous -> flatten and drop batch padding.
    return out.reshape(-1)[:B]


def dqn_forward(obs, act, params, *, block_b=4096):
    """obs: [B, obs_dim], act: [B, act_dim] -> q-values [B] (last dim squeezed)."""
    B = obs.shape[0]
    tb, grid_b = _choose_tiling(B, block_b, _num_batch_cores())
    return _dqn_forward_impl(
        obs, act, params, tb=tb, grid_b=grid_b, bf16_tanh=_bf16_tanh_capable()
    )


def init_dqn_params(key, obs_dim, act_dim, hid_sizes, weight_dtype=jnp.bfloat16):
    """torch.nn.Linear default init. Hidden weights stored [in, out] (W^T vs
    torch) in bf16; W1 pre-split into obs/act halves; final layer kept as its
    natural (1, hidden) row vector for the lane-dense epilogue; biases f32."""
    sizes = [obs_dim + act_dim] + list(hid_sizes) + [1]
    raw = []
    for j in range(len(sizes) - 1):
        key, kw, kb = jax.random.split(key, 3)
        bound = 1.0 / (sizes[j] ** 0.5)
        w = jax.random.uniform(kw, (sizes[j], sizes[j + 1]), jnp.float32, -bound, bound)
        b = jax.random.uniform(kb, (1, sizes[j + 1]), jnp.float32, -bound, bound)
        raw += [w, b]
    w1, b1, w2, b2, w3, b3 = raw
    w1o = w1[:obs_dim].astype(weight_dtype)
    w1a = w1[obs_dim:].astype(weight_dtype)
    w2 = w2.astype(weight_dtype)
    w3 = w3.T.astype(weight_dtype)   # (1, hid) row vector
    return (w1o, w1a, b1, w2, b2, w3, b3)


if __name__ == "__main__":
    # Small deterministic demo shapes: batch=8, obs_dim=12, act_dim=4, hidden=[32,32]
    B, obs_dim, act_dim = 8, 12, 4
    hid_sizes = [32, 32]

    key = jax.random.PRNGKey(0)
    k_obs, k_act, k_params = jax.random.split(key, 3)

    obs = jax.random.normal(k_obs, (B, obs_dim), jnp.float32)
    act = jax.random.normal(k_act, (B, act_dim), jnp.float32)
    params = init_dqn_params(k_params, obs_dim, act_dim, hid_sizes)

    q = dqn_forward(obs, act, params)
    jax.block_until_ready(q)
    assert q.shape == (B,), q.shape

    # Pure-JAX reference mirroring the kernel's bf16-weight / f32-accumulate
    # math (and the same tanh precision path as selected for this chip).
    bf16_tanh = _bf16_tanh_capable()

    def ref_act(z):
        return _activation(z, bf16_tanh)

    w1o, w1a, b1, w2, b2, w3, b3 = params
    x_bf = jnp.concatenate([obs, act], axis=-1).astype(jnp.bfloat16)
    w1 = jnp.concatenate([w1o, w1a], axis=0)
    r1 = ref_act(jnp.dot(x_bf, w1, preferred_element_type=jnp.float32) + b1)
    r2 = ref_act(jnp.dot(r1, w2, preferred_element_type=jnp.float32) + b2)
    ref = (
        jnp.dot(r2, w3.T, preferred_element_type=jnp.float32) + b3[0, 0]
    )[:, 0]

    # bf16 weights/activations give ~1e-2-level agreement with an f32 torch
    # reference; tolerance here covers rounding-path differences only.
    assert jnp.allclose(q, ref, atol=2e-2, rtol=2e-2), (q, ref)
    print("KERNEL_OK")
</pallas_src>

<mosaic_0001>
module attributes {stable_mosaic.version = 11 : i64} {
  func.func @dqn_mlp_kernel(%arg0: i32, %arg1: memref<128x12xf32, #tpu.memory_space<vmem>>, %arg2: memref<128x4xf32, #tpu.memory_space<vmem>>, %arg3: memref<12x32xbf16, #tpu.memory_space<vmem>>, %arg4: memref<4x32xbf16, #tpu.memory_space<vmem>>, %arg5: memref<1x32xf32, #tpu.memory_space<vmem>>, %arg6: memref<32x32xbf16, #tpu.memory_space<vmem>>, %arg7: memref<1x32xf32, #tpu.memory_space<vmem>>, %arg8: memref<1x32xbf16, #tpu.memory_space<vmem>>, %arg9: memref<1x1xf32, #tpu.memory_space<smem>>, %arg10: memref<1x1x128xf32, #tpu.memory_space<vmem>>) attributes {dimension_semantics = [#tpu.dimension_semantics<parallel>], iteration_bounds = array<i64: 1>, scalar_prefetch = 0 : i64, scratch_operands = 0 : i64, tpu.core_type = #tpu.core_type<tc>, window_params = [{transform_indices = @transform_0, window_bounds = array<i64: 128, 12>}, {transform_indices = @transform_1, window_bounds = array<i64: 128, 4>}, {pipeline_mode = #tpu.pipeline_mode<synchronous>, transform_indices = @transform_2, window_bounds = array<i64: 12, 32>}, {pipeline_mode = #tpu.pipeline_mode<synchronous>, transform_indices = @transform_3, window_bounds = array<i64: 4, 32>}, {pipeline_mode = #tpu.pipeline_mode<synchronous>, transform_indices = @transform_4, window_bounds = array<i64: 1, 32>}, {pipeline_mode = #tpu.pipeline_mode<synchronous>, transform_indices = @transform_5, window_bounds = array<i64: 32, 32>}, {pipeline_mode = #tpu.pipeline_mode<synchronous>, transform_indices = @transform_6, window_bounds = array<i64: 1, 32>}, {pipeline_mode = #tpu.pipeline_mode<synchronous>, transform_indices = @transform_7, window_bounds = array<i64: 1, 32>}, {transform_indices = @transform_8, window_bounds = array<i64: 1, 1>}, {transform_indices = @transform_9, window_bounds = array<i64: 1, 1, 128>}]} {
    %c0 = arith.constant 0 : index
    %c0_0 = arith.constant 0 : index
    %0 = vector.load %arg1[%c0, %c0_0] : memref<128x12xf32, #tpu.memory_space<vmem>>, vector<128x12xf32>
    %1 = arith.truncf %0 : vector<128x12xf32> to vector<128x12xbf16>
    %c0_1 = arith.constant 0 : index
    %c0_2 = arith.constant 0 : index
    %2 = vector.load %arg2[%c0_1, %c0_2] : memref<128x4xf32, #tpu.memory_space<vmem>>, vector<128x4xf32>
    %3 = arith.truncf %2 : vector<128x4xf32> to vector<128x4xbf16>
    %c0_3 = arith.constant 0 : index
    %c0_4 = arith.constant 0 : index
    %4 = vector.load %arg3[%c0_3, %c0_4] : memref<12x32xbf16, #tpu.memory_space<vmem>>, vector<12x32xbf16>
    %cst = arith.constant dense<0.000000e+00> : vector<128x32xf32>
    %5 = tpu.matmul %1, %4, %cst {dimension_numbers = #tpu.dot_dimension_numbers<[1], [0], [0], [1], [0, 0, 1, 1], [], []>} : vector<128x12xbf16>, vector<12x32xbf16>, vector<128x32xf32> -> vector<128x32xf32>
    %c0_5 = arith.constant 0 : index
    %c0_6 = arith.constant 0 : index
    %6 = vector.load %arg4[%c0_5, %c0_6] : memref<4x32xbf16, #tpu.memory_space<vmem>>, vector<4x32xbf16>
    %cst_7 = arith.constant dense<0.000000e+00> : vector<128x32xf32>
    %7 = tpu.matmul %3, %6, %cst_7 {dimension_numbers = #tpu.dot_dimension_numbers<[1], [0], [0], [1], [0, 0, 1, 1], [], []>} : vector<128x4xbf16>, vector<4x32xbf16>, vector<128x32xf32> -> vector<128x32xf32>
    %8 = arith.addf %5, %7 : vector<128x32xf32>
    %c0_8 = arith.constant 0 : index
    %c0_9 = arith.constant 0 : index
    %9 = vector.load %arg5[%c0_8, %c0_9] : memref<1x32xf32, #tpu.memory_space<vmem>>, vector<1x32xf32>
    %10 = vector.broadcast %9 : vector<1x32xf32> to vector<128x32xf32>
    %11 = arith.addf %8, %10 : vector<128x32xf32>
    %12 = math.tanh %11 : vector<128x32xf32>
    %13 = arith.truncf %12 : vector<128x32xf32> to vector<128x32xbf16>
    %c0_10 = arith.constant 0 : index
    %c0_11 = arith.constant 0 : index
    %14 = vector.load %arg6[%c0_10, %c0_11] : memref<32x32xbf16, #tpu.memory_space<vmem>>, vector<32x32xbf16>
    %cst_12 = arith.constant dense<0.000000e+00> : vector<128x32xf32>
    %15 = tpu.matmul %13, %14, %cst_12 {dimension_numbers = #tpu.dot_dimension_numbers<[1], [0], [0], [1], [0, 0, 1, 1], [], []>} : vector<128x32xbf16>, vector<32x32xbf16>, vector<128x32xf32> -> vector<128x32xf32>
    %c0_13 = arith.constant 0 : index
    %c0_14 = arith.constant 0 : index
    %16 = vector.load %arg7[%c0_13, %c0_14] : memref<1x32xf32, #tpu.memory_space<vmem>>, vector<1x32xf32>
    %17 = vector.broadcast %16 : vector<1x32xf32> to vector<128x32xf32>
    %18 = arith.addf %15, %17 : vector<128x32xf32>
    %19 = math.tanh %18 : vector<128x32xf32>
    %20 = arith.truncf %19 : vector<128x32xf32> to vector<128x32xbf16>
    %c0_15 = arith.constant 0 : index
    %c0_16 = arith.constant 0 : index
    %21 = vector.load %arg8[%c0_15, %c0_16] : memref<1x32xbf16, #tpu.memory_space<vmem>>, vector<1x32xbf16>
    %cst_17 = arith.constant dense<0.000000e+00> : vector<1x128xf32>
    %22 = tpu.matmul %21, %20, %cst_17 {dimension_numbers = #tpu.dot_dimension_numbers<[1], [1], [0], [0], [0, 0, 1, 0], [], []>} : vector<1x32xbf16>, vector<128x32xbf16>, vector<1x128xf32> -> vector<1x128xf32>
    %c0_18 = arith.constant 0 : index
    %c0_19 = arith.constant 0 : index
    %23 = memref.load %arg9[%c0_18, %c0_19] : memref<1x1xf32, #tpu.memory_space<smem>>
    %24 = vector.broadcast %23 : f32 to vector<1x128xf32>
    %25 = arith.addf %22, %24 : vector<1x128xf32>
    %c0_20 = arith.constant 0 : index
    %c0_21 = arith.constant 0 : index
    %c0_22 = arith.constant 0 : index
    %26 = vector.load %arg10[%c0_20, %c0_21, %c0_22] : memref<1x1x128xf32, #tpu.memory_space<vmem>>, vector<1x1x128xf32>
    %27 = vector.shape_cast %26 : vector<1x1x128xf32> to vector<1x128xf32>
    %28 = vector.shape_cast %25 : vector<1x128xf32> to vector<1x1x128xf32>
    tpu.vector_store %arg10[%c0_20, %c0_21, %c0_22], %28 {strides = array<i32>} : memref<1x1x128xf32, #tpu.memory_space<vmem>>, vector<1x1x128xf32>,
    return
  }
  func.func @transform_0(%arg0: i32) -> (i32, i32) {
    %c0_i32 = arith.constant 0 : i32
    %c0_i32_0 = arith.constant 0 : i32
    return %arg0, %c0_i32 : i32, i32
  }
  func.func @transform_1(%arg0: i32) -> (i32, i32) {
    %c0_i32 = arith.constant 0 : i32
    %c0_i32_0 = arith.constant 0 : i32
    return %arg0, %c0_i32 : i32, i32
  }
  func.func @transform_2(%arg0: i32) -> (i32, i32) {
    %c0_i32 = arith.constant 0 : i32
    %c0_i32_0 = arith.constant 0 : i32
    %c0_i32_1 = arith.constant 0 : i32
    return %c0_i32, %c0_i32_0 : i32, i32
  }
  func.func @transform_3(%arg0: i32) -> (i32, i32) {
    %c0_i32 = arith.constant 0 : i32
    %c0_i32_0 = arith.constant 0 : i32
    %c0_i32_1 = arith.constant 0 : i32
    return %c0_i32, %c0_i32_0 : i32, i32
  }
  func.func @transform_4(%arg0: i32) -> (i32, i32) {
    %c0_i32 = arith.constant 0 : i32
    %c0_i32_0 = arith.constant 0 : i32
    %c0_i32_1 = arith.constant 0 : i32
    return %c0_i32, %c0_i32_0 : i32, i32
  }
  func.func @transform_5(%arg0: i32) -> (i32, i32) {
    %c0_i32 = arith.constant 0 : i32
    %c0_i32_0 = arith.constant 0 : i32
    %c0_i32_1 = arith.constant 0 : i32
    return %c0_i32, %c0_i32_0 : i32, i32
  }
  func.func @transform_6(%arg0: i32) -> (i32, i32) {
    %c0_i32 = arith.constant 0 : i32
    %c0_i32_0 = arith.constant 0 : i32
    %c0_i32_1 = arith.constant 0 : i32
    return %c0_i32, %c0_i32_0 : i32, i32
  }
  func.func @transform_7(%arg0: i32) -> (i32, i32) {
    %c0_i32 = arith.constant 0 : i32
    %c0_i32_0 = arith.constant 0 : i32
    %c0_i32_1 = arith.constant 0 : i32
    return %c0_i32, %c0_i32_0 : i32, i32
  }
  func.func @transform_8(%arg0: i32) -> (i32, i32) {
    %c0_i32 = arith.constant 0 : i32
    %c0_i32_0 = arith.constant 0 : i32
    %c0_i32_1 = arith.constant 0 : i32
    return %c0_i32, %c0_i32_0 : i32, i32
  }
  func.func @transform_9(%arg0: i32) -> (i32, i32, i32) {
    %c0_i32 = arith.constant 0 : i32
    %c0_i32_0 = arith.constant 0 : i32
    %c0_i32_1 = arith.constant 0 : i32
    return %arg0, %c0_i32, %c0_i32_0 : i32, i32, i32
  }
}

</mosaic_0001>

<llo_original>
// kernel: _dqn_forward_impl.1
$region0: #{_dqn_forward_impl.1}
  #allocation0 [shape = 'u32[]', space=smem, size = 0x4, offset = 0x4, fixed_abs, tag = 'smem constant byte address 0x4 - core index']
  #allocation1 [shape = 'u32[144,128]{1,0:T(1,128)}', space=vmem, size = 0x12000, scoped, tag = 'internal scratch']
  #allocation2 [shape = 'f32[1,1]{1,0:T(1,128)S(6)}', space=smem, size = 0x200, scoped, tag = 'scoped memory for _dqn_forward_impl.1']
  %s0 = inlined_call_operand.vmem [shape: f32[128,12], index: 0, kind: input, shape index: {}]
  %s1 = inlined_call_operand.vmem [shape: f32[128,4], index: 1, kind: input, shape index: {}]
  %s2 = inlined_call_operand.vmem [shape: bf16[12,32], index: 2, kind: input, shape index: {}]
  %s3 = inlined_call_operand.vmem [shape: bf16[4,32], index: 3, kind: input, shape index: {}]
  %s4 = inlined_call_operand.vmem [shape: f32[1,32], index: 4, kind: input, shape index: {}]
  %s5 = inlined_call_operand.vmem [shape: bf16[32,32], index: 5, kind: input, shape index: {}]
  %s6 = inlined_call_operand.vmem [shape: f32[1,32], index: 6, kind: input, shape index: {}]
  %s7 = inlined_call_operand.vmem [shape: bf16[1,32], index: 7, kind: input, shape index: {}]
  %s8 = inlined_call_operand.<no memory space> [shape: f32[1,1], index: 8, kind: input, shape index: {}]
  %s9 = inlined_call_operand.vmem [shape: f32[1,1,128], index: 9, kind: output, shape index: {}]
  %s10 = sld [smem:[#allocation0]]
  $region46: #{_dqn_forward_impl.1} parent=0
    _
  %s12 = ssub.s32 1, %s10
  %s13 = scalar_select 0, %s12, %s10
  %14 = sst [smem:[#allocation2]] %s8
  // Predicated region
  $region2: #{_dqn_forward_impl.1} parent=0 // pred_check
    _
  $region3: #{_dqn_forward_impl.1} parent=0 // pred_check_branch
    %16 = sbr.rel (0) target = $region5
  $region4: #{_dqn_forward_impl.1} parent=0 // pred_region
    _
  $region5: #{_dqn_forward_impl.1} parent=0 // pred_fallthru
    _
  // Predicated region
  $region6: #{_dqn_forward_impl.1} parent=0 // pred_check
    _
  $region7: #{_dqn_forward_impl.1} parent=0 // pred_check_branch
    %18 = sbr.rel (0) target = $region9
  $region8: #{_dqn_forward_impl.1} parent=0 // pred_region
    _
  $region9: #{_dqn_forward_impl.1} parent=0 // pred_fallthru
    _
  // Predicated region
  $region10: #{_dqn_forward_impl.1} parent=0 // pred_check
    _
  $region11: #{_dqn_forward_impl.1} parent=0 // pred_check_branch
    %20 = sbr.rel (0) target = $region13
  $region12: #{_dqn_forward_impl.1} parent=0 // pred_region
    _
  $region13: #{_dqn_forward_impl.1} parent=0 // pred_fallthru
    _
  // Predicated region
  $region14: #{_dqn_forward_impl.1} parent=0 // pred_check
    _
  $region15: #{_dqn_forward_impl.1} parent=0 // pred_check_branch
    %22 = sbr.rel (0) target = $region17
  $region16: #{_dqn_forward_impl.1} parent=0 // pred_region
    _
  $region17: #{_dqn_forward_impl.1} parent=0 // pred_fallthru
    _
  // Predicated region
  $region18: #{_dqn_forward_impl.1} parent=0 // pred_check
    _
  $region19: #{_dqn_forward_impl.1} parent=0 // pred_check_branch
    %24 = sbr.rel (0) target = $region21
  $region20: #{_dqn_forward_impl.1} parent=0 // pred_region
    _
  $region21: #{_dqn_forward_impl.1} parent=0 // pred_fallthru
    _
  // Predicated region
  $region22: #{_dqn_forward_impl.1} parent=0 // pred_check
    _
  $region23: #{_dqn_forward_impl.1} parent=0 // pred_check_branch
    %26 = sbr.rel (0) target = $region25
  $region24: #{_dqn_forward_impl.1} parent=0 // pred_region
    _
  $region25: #{_dqn_forward_impl.1} parent=0 // pred_fallthru
    _
  // Predicated region
  $region26: #{_dqn_forward_impl.1} parent=0 // pred_check
    _
  $region27: #{_dqn_forward_impl.1} parent=0 // pred_check_branch
    %28 = sbr.rel (0) target = $region29
  $region28: #{_dqn_forward_impl.1} parent=0 // pred_region
    _
  $region29: #{_dqn_forward_impl.1} parent=0 // pred_fallthru
    _
  // Predicated region
  $region30: #{_dqn_forward_impl.1} parent=0 // pred_check
    _
  $region31: #{_dqn_forward_impl.1} parent=0 // pred_check_branch
    %30 = sbr.rel (0) target = $region33
  $region32: #{_dqn_forward_impl.1} parent=0 // pred_region
    _
  $region33: #{_dqn_forward_impl.1} parent=0 // pred_fallthru
    _
  // Predicated region
  $region34: #{_dqn_forward_impl.1} parent=0 // pred_check
    _
  $region35: #{_dqn_forward_impl.1} parent=0 // pred_check_branch
    %32 = sbr.rel (0) target = $region37
  $region36: #{_dqn_forward_impl.1} parent=0 // pred_region
    _
  $region37: #{_dqn_forward_impl.1} parent=0 // pred_fallthru
    _
  %v34 = vld [vmem:[%s0] sm:$0xff]
  %v35 = vld [vmem:[%s0 + $0x8] sm:$0xff]
  %v36 = vld [vmem:[%s0 + $0x10] sm:$0xff]
  %v37 = vld [vmem:[%s0 + $0x18] sm:$0xff]
  %v38 = vld [vmem:[%s0 + $0x20] sm:$0xff]
  %v39 = vld [vmem:[%s0 + $0x28] sm:$0xff]
  %v40 = vld [vmem:[%s0 + $0x30] sm:$0xff]
  %v41 = vld [vmem:[%s0 + $0x38] sm:$0xff]
  %v42 = vld [vmem:[%s0 + $0x40] sm:$0xff]
  %v43 = vld [vmem:[%s0 + $0x48] sm:$0xff]
  %v44 = vld [vmem:[%s0 + $0x50] sm:$0xff]
  %v45 = vld [vmem:[%s0 + $0x58] sm:$0xff]
  %v46 = vld [vmem:[%s0 + $0x60] sm:$0xff]
  %v47 = vld [vmem:[%s0 + $0x68] sm:$0xff]
  %v48 = vld [vmem:[%s0 + $0x70] sm:$0xff]
  %v49 = vld [vmem:[%s0 + $0x78] sm:$0xff]
  %v50 = vpack.c.bf16 %v35, %v34
  %v51 = vpack.c.bf16 %v37, %v36
  %v52 = vpack.c.bf16 %v39, %v38
  %v53 = vpack.c.bf16 %v41, %v40
  %v54 = vpack.c.bf16 %v43, %v42
  %v55 = vpack.c.bf16 %v45, %v44
  %v56 = vpack.c.bf16 %v47, %v46
  %v57 = vpack.c.bf16 %v49, %v48
  %v58 = vld [vmem:[%s1] sm:$0xff]
  %v59 = vld [vmem:[%s1 + $0x8] sm:$0xff]
  %v60 = vld [vmem:[%s1 + $0x10] sm:$0xff]
  %v61 = vld [vmem:[%s1 + $0x18] sm:$0xff]
  %v62 = vld [vmem:[%s1 + $0x20] sm:$0xff]
  %v63 = vld [vmem:[%s1 + $0x28] sm:$0xff]
  %v64 = vld [vmem:[%s1 + $0x30] sm:$0xff]
  %v65 = vld [vmem:[%s1 + $0x38] sm:$0xff]
  %v66 = vld [vmem:[%s1 + $0x40] sm:$0xff]
  %v67 = vld [vmem:[%s1 + $0x48] sm:$0xff]
  %v68 = vld [vmem:[%s1 + $0x50] sm:$0xff]
  %v69 = vld [vmem:[%s1 + $0x58] sm:$0xff]
  %v70 = vld [vmem:[%s1 + $0x60] sm:$0xff]
  %v71 = vld [vmem:[%s1 + $0x68] sm:$0xff]
  %v72 = vld [vmem:[%s1 + $0x70] sm:$0xff]
  %v73 = vld [vmem:[%s1 + $0x78] sm:$0xff]
  %v74 = vpack.c.bf16 %v59, %v58
  %v75 = vpack.c.bf16 %v61, %v60
  %v76 = vpack.c.bf16 %v63, %v62
  %v77 = vpack.c.bf16 %v65, %v64
  %v78 = vpack.c.bf16 %v67, %v66
  %v79 = vpack.c.bf16 %v69, %v68
  %v80 = vpack.c.bf16 %v71, %v70
  %v81 = vpack.c.bf16 %v73, %v72
  %v82 = vld [vmem:[%s2] sm:$0xf]
  %v83 = vld [vmem:[%s2 + $0x4] sm:$0x3]
  %v84 = vld [vmem:[%s3] sm:$0x3]
  %vm85 = vcmask 31744
  %v87 = vsel %vm85, %v74, 0
  %v90 = vsel %vm85, %v75, 0
  %v93 = vsel %vm85, %v76, 0
  %v96 = vsel %vm85, %v77, 0
  %v99 = vsel %vm85, %v78, 0
  %v102 = vsel %vm85, %v79, 0
  %v105 = vsel %vm85, %v80, 0
  %v108 = vsel %vm85, %v81, 0
  %vm110 = vcmask 1041408
  %v112 = vsel %vm110, %v84, 0
  %114 = vmatprep.subr.bf16.mxu0 0
  %115 = vmatpush1.bf16.msra.mxu0 %v112
  %116 = vmatprep.subr.bf16.mxu0 0
  %117 = vmatpush1.bf16.msra.mxu0 0
  %118 = vmatprep.subr.bf16.mxu0 0
  %119 = vmatpush1.bf16.msra.mxu0 0
  %120 = vmatprep.subr.bf16.mxu0 0
  %121 = vmatpush1.bf16.msra.mxu0 0
  %122 = vmatprep.subr.bf16.mxu0 0
  %123 = vmatpush1.bf16.msra.mxu0 0
  %124 = vmatprep.subr.bf16.mxu0 0
  %125 = vmatpush1.bf16.msra.mxu0 0
  %126 = vmatprep.subr.bf16.mxu0 0
  %127 = vmatpush1.bf16.msra.mxu0 0
  %128 = vmatprep.subr.bf16.mxu0 0
  %129 = vmatpush1.bf16.msra.mxu0 0
  %130 = vmatprep.subr.bf16.mxu0 0
  %131 = vmatpush1.bf16.msra.mxu0 0
  %132 = vmatprep.subr.bf16.mxu0 0
  %133 = vmatpush1.bf16.msra.mxu0 0
  %134 = vmatprep.subr.bf16.mxu0 0
  %135 = vmatpush1.bf16.msra.mxu0 0
  %136 = vmatprep.subr.bf16.mxu0 0
  %137 = vmatpush1.bf16.msra.mxu0 0
  %138 = vmatprep.subr.bf16.mxu0 0
  %139 = vmatpush1.bf16.msra.mxu0 0
  %140 = vmatprep.subr.bf16.mxu0 0
  %141 = vmatpush1.bf16.msra.mxu0 0
  %142 = vmatprep.subr.bf16.mxu0 0
  %143 = vmatpush1.bf16.msra.mxu0 0
  %144 = vmatprep.subr.bf16.mxu0 0
  %145 = vmatpush1.bf16.msra.mxu0 0
  %146 = vmatprep.mubr.bf16.mxu0 0
  %147 = vmatmul.mubr.bf16.gmra.mrb[0].mxu0 %v87
  %v148 = vpop.f32.mrb[0].mxu0
  %v149 = vadd.f32 0.0, %v148
  %v150 = vpop.f32.mrb[0].mxu0
  %v151 = vpop.f32.mrb[0].mxu0
  %v152 = vadd.f32 0.0, %v151
  %v153 = vpop.f32.mrb[0].mxu0
  %154 = vmatprep.mubr.bf16.mxu0 0
  %155 = vmatmul.mubr.bf16.gmra.mrb[0].mxu0 %v90
  %v156 = vpop.f32.mrb[0].mxu0
  %v157 = vadd.f32 0.0, %v156
  %v158 = vpop.f32.mrb[0].mxu0
  %v159 = vpop.f32.mrb[0].mxu0
  %v160 = vadd.f32 0.0, %v159
  %v161 = vpop.f32.mrb[0].mxu0
  %162 = vmatprep.mubr.bf16.mxu0 0
  %163 = vmatmul.mubr.bf16.gmra.mrb[0].mxu0 %v93
  %v164 = vpop.f32.mrb[0].mxu0
  %v165 = vadd.f32 0.0, %v164
  %v166 = vpop.f32.mrb[0].mxu0
  %v167 = vpop.f32.mrb[0].mxu0
  %v168 = vadd.f32 0.0, %v167
  %v169 = vpop.f32.mrb[0].mxu0
  %170 = vmatprep.mubr.bf16.mxu0 0
  %171 = vmatmul.mubr.bf16.gmra.mrb[0].mxu0 %v96
  %v172 = vpop.f32.mrb[0].mxu0
  %v173 = vadd.f32 0.0, %v172
  %v174 = vpop.f32.mrb[0].mxu0
  %v175 = vpop.f32.mrb[0].mxu0
  %v176 = vadd.f32 0.0, %v175
  %v177 = vpop.f32.mrb[0].mxu0
  %178 = vmatprep.mubr.bf16.mxu0 0
  %179 = vmatmul.mubr.bf16.gmra.mrb[0].mxu0 %v99
  %v180 = vpop.f32.mrb[0].mxu0
  %v181 = vadd.f32 0.0, %v180
  %v182 = vpop.f32.mrb[0].mxu0
  %v183 = vpop.f32.mrb[0].mxu0
  %v184 = vadd.f32 0.0, %v183
  %v185 = vpop.f32.mrb[0].mxu0
  %186 = vmatprep.mubr.bf16.mxu0 0
  %187 = vmatmul.mubr.bf16.gmra.mrb[0].mxu0 %v102
  %v188 = vpop.f32.mrb[0].mxu0
  %v189 = vadd.f32 0.0, %v188
  %v190 = vpop.f32.mrb[0].mxu0
  %v191 = vpop.f32.mrb[0].mxu0
  %v192 = vadd.f32 0.0, %v191
  %v193 = vpop.f32.mrb[0].mxu0
  %194 = vmatprep.mubr.bf16.mxu0 0
  %195 = vmatmul.mubr.bf16.gmra.mrb[0].mxu0 %v105
  %v196 = vpop.f32.mrb[0].mxu0
  %v197 = vadd.f32 0.0, %v196
  %v198 = vpop.f32.mrb[0].mxu0
  %v199 = vpop.f32.mrb[0].mxu0
  %v200 = vadd.f32 0.0, %v199
  %v201 = vpop.f32.mrb[0].mxu0
  %202 = vmatprep.mubr.bf16.mxu0 0
  %203 = vmatmul.mubr.bf16.gmra.mrb[0].mxu0 %v108
  %v204 = vpop.f32.mrb[0].mxu0
  %v205 = vadd.f32 0.0, %v204
  %v206 = vpop.f32.mrb[0].mxu0
  %v207 = vpop.f32.mrb[0].mxu0
  %v208 = vadd.f32 0.0, %v207
  %v209 = vpop.f32.mrb[0].mxu0
  %210 = vdwg.mxu0
  %v213 = vunpack.c.l.b16 %v82
  %v214 = vunpack.c.l.b16 %v83
  %v215 = vpack.c.b16 %v214, %v213
  %vm216 = vcmask 97280
  %v218 = vsel %vm216, %v50, 0
  %v221 = vsel %vm216, %v51, 0
  %v224 = vsel %vm216, %v52, 0
  %v227 = vsel %vm216, %v53, 0
  %v230 = vsel %vm216, %v54, 0
  %v233 = vsel %vm216, %v55, 0
  %v236 = vsel %vm216, %v56, 0
  %v239 = vsel %vm216, %v57, 0
  %vm241 = vcmask 1045504
  %v243 = vsel %vm241, %v215, 0
  %245 = vmatprep.subr.bf16.mxu0 0
  %246 = vmatpush1.bf16.msra.mxu0 %v243
  %247 = vmatprep.subr.bf16.mxu0 0
  %248 = vmatpush1.bf16.msra.mxu0 0
  %249 = vmatprep.subr.bf16.mxu0 0
  %250 = vmatpush1.bf16.msra.mxu0 0
  %251 = vmatprep.subr.bf16.mxu0 0
  %252 = vmatpush1.bf16.msra.mxu0 0
  %253 = vmatprep.subr.bf16.mxu0 0
  %254 = vmatpush1.bf16.msra.mxu0 0
  %255 = vmatprep.subr.bf16.mxu0 0
  %256 = vmatpush1.bf16.msra.mxu0 0
  %257 = vmatprep.subr.bf16.mxu0 0
  %258 = vmatpush1.bf16.msra.mxu0 0
  %259 = vmatprep.subr.bf16.mxu0 0
  %260 = vmatpush1.bf16.msra.mxu0 0
  %261 = vmatprep.subr.bf16.mxu0 0
  %262 = vmatpush1.bf16.msra.mxu0 0
  %263 = vmatprep.subr.bf16.mxu0 0
  %264 = vmatpush1.bf16.msra.mxu0 0
  %265 = vmatprep.subr.bf16.mxu0 0
  %266 = vmatpush1.bf16.msra.mxu0 0
  %267 = vmatprep.subr.bf16.mxu0 0
  %268 = vmatpush1.bf16.msra.mxu0 0
  %269 = vmatprep.subr.bf16.mxu0 0
  %270 = vmatpush1.bf16.msra.mxu0 0
  %271 = vmatprep.subr.bf16.mxu0 0
  %272 = vmatpush1.bf16.msra.mxu0 0
  %273 = vmatprep.subr.bf16.mxu0 0
  %274 = vmatpush1.bf16.msra.mxu0 0
  %275 = vmatprep.subr.bf16.mxu0 0
  %276 = vmatpush1.bf16.msra.mxu0 0
  %277 = vmatprep.mubr.bf16.mxu0 0
  %278 = vmatmul.mubr.bf16.gmra.mrb[0].mxu0 %v218
  %v279 = vpop.f32.mrb[0].mxu0
  %v280 = vadd.f32 %v149, %v279
  %v281 = vpop.f32.mrb[0].mxu0
  %v282 = vpop.f32.mrb[0].mxu0
  %v283 = vadd.f32 %v152, %v282
  %v284 = vpop.f32.mrb[0].mxu0
  %285 = vmatprep.mubr.bf16.mxu0 0
  %286 = vmatmul.mubr.bf16.gmra.mrb[0].mxu0 %v221
  %v287 = vpop.f32.mrb[0].mxu0
  %v288 = vadd.f32 %v157, %v287
  %v289 = vpop.f32.mrb[0].mxu0
  %v290 = vpop.f32.mrb[0].mxu0
  %v291 = vadd.f32 %v160, %v290
  %v292 = vpop.f32.mrb[0].mxu0
  %293 = vmatprep.mubr.bf16.mxu0 0
  %294 = vmatmul.mubr.bf16.gmra.mrb[0].mxu0 %v224
  %v295 = vpop.f32.mrb[0].mxu0
  %v296 = vadd.f32 %v165, %v295
  %v297 = vpop.f32.mrb[0].mxu0
  %v298 = vpop.f32.mrb[0].mxu0
  %v299 = vadd.f32 %v168, %v298
  %v300 = vpop.f32.mrb[0].mxu0
  %301 = vmatprep.mubr.bf16.mxu0 0
  %302 = vmatmul.mubr.bf16.gmra.mrb[0].mxu0 %v227
  %v303 = vpop.f32.mrb[0].mxu0
  %v304 = vadd.f32 %v173, %v303
  %v305 = vpop.f32.mrb[0].mxu0
  %v306 = vpop.f32.mrb[0].mxu0
  %v307 = vadd.f32 %v176, %v306
  %v308 = vpop.f32.mrb[0].mxu0
  %309 = vmatprep.mubr.bf16.mxu0 0
  %310 = vmatmul.mubr.bf16.gmra.mrb[0].mxu0 %v230
  %v311 = vpop.f32.mrb[0].mxu0
  %v312 = vadd.f32 %v181, %v311
  %v313 = vpop.f32.mrb[0].mxu0
  %v314 = vpop.f32.mrb[0].mxu0
  %v315 = vadd.f32 %v184, %v314
  %v316 = vpop.f32.mrb[0].mxu0
  %317 = vmatprep.mubr.bf16.mxu0 0
  %318 = vmatmul.mubr.bf16.gmra.mrb[0].mxu0 %v233
  %v319 = vpop.f32.mrb[0].mxu0
  %v320 = vadd.f32 %v189, %v319
  %v321 = vpop.f32.mrb[0].mxu0
  %v322 = vpop.f32.mrb[0].mxu0
  %v323 = vadd.f32 %v192, %v322
  %v324 = vpop.f32.mrb[0].mxu0
  %325 = vmatprep.mubr.bf16.mxu0 0
  %326 = vmatmul.mubr.bf16.gmra.mrb[0].mxu0 %v236
  %v327 = vpop.f32.mrb[0].mxu0
  %v328 = vadd.f32 %v197, %v327
  %v329 = vpop.f32.mrb[0].mxu0
  %v330 = vpop.f32.mrb[0].mxu0
  %v331 = vadd.f32 %v200, %v330
  %v332 = vpop.f32.mrb[0].mxu0
  %333 = vmatprep.mubr.bf16.mxu0 0
  %334 = vmatmul.mubr.bf16.gmra.mrb[0].mxu0 %v239
  %v335 = vpop.f32.mrb[0].mxu0
  %v336 = vadd.f32 %v205, %v335
  %v337 = vpop.f32.mrb[0].mxu0
  %v338 = vpop.f32.mrb[0].mxu0
  %v339 = vadd.f32 %v208, %v338
  %v340 = vpop.f32.mrb[0].mxu0
  %341 = vdwg.mxu0
  %v342 = vld [vmem:[%s4] sm:$0x1]
  %v344 = vlaneseq
  %v345 = vshrl.u32 %v344, 7
  %v346 = vsub.s32 0, %v345
  %v347 = vrot.slane %v342, %v346
  %v349 = vadd.f32 %v280, %v347
  %v350 = vadd.f32 %v283, %v347
  %v351 = vadd.f32 %v288, %v347
  %v352 = vadd.f32 %v291, %v347
  %v353 = vadd.f32 %v296, %v347
  %v354 = vadd.f32 %v299, %v347
  %v355 = vadd.f32 %v304, %v347
  %v356 = vadd.f32 %v307, %v347
  %v357 = vadd.f32 %v312, %v347
  %v358 = vadd.f32 %v315, %v347
  %v359 = vadd.f32 %v320, %v347
  %v360 = vadd.f32 %v323, %v347
  %v361 = vadd.f32 %v328, %v347
  %v362 = vadd.f32 %v331, %v347
  %v363 = vadd.f32 %v336, %v347
  %v364 = vadd.f32 %v339, %v347
  %v365 = vtanh.pop %v349
  %v366 = vtanh.pop %v350
  %v367 = vtanh.pop %v351
  %v368 = vtanh.pop %v352
  %v369 = vtanh.pop %v353
  %v370 = vtanh.pop %v354
  %v371 = vtanh.pop %v355
  %v372 = vtanh.pop %v356
  %v373 = vtanh.pop %v357
  %v374 = vtanh.pop %v358
  %v375 = vtanh.pop %v359
  %v376 = vtanh.pop %v360
  %v377 = vtanh.pop %v361
  %v378 = vtanh.pop %v362
  %v379 = vtanh.pop %v363
  %v380 = vtanh.pop %v364
  %v381 = vpack.c.bf16 %v366, %v365
  %v382 = vpack.c.bf16 %v368, %v367
  %v383 = vpack.c.bf16 %v370, %v369
  %v384 = vpack.c.bf16 %v372, %v371
  %v385 = vpack.c.bf16 %v374, %v373
  %v386 = vpack.c.bf16 %v376, %v375
  %v387 = vpack.c.bf16 %v378, %v377
  %v388 = vpack.c.bf16 %v380, %v379
  %v389 = vld [vmem:[%s5] sm:$0xf]
  %v390 = vld [vmem:[%s5 + $0x4] sm:$0xf]
  %v391 = vld [vmem:[%s5 + $0x8] sm:$0xf]
  %v392 = vld [vmem:[%s5 + $0xc] sm:$0xf]
  %v393 = vld [vmem:[%s6] sm:$0x1]
  %v395 = vlaneseq
  %v396 = vshrl.u32 %v395, 7
  %v397 = vsub.s32 0, %v396
  %v398 = vrot.slane %v393, %v397
  %v404 = vunpack.c.l.b16 %v389
  %v405 = vunpack.c.l.b16 %v390
  %v406 = vunpack.c.l.b16 %v391
  %v407 = vunpack.c.l.b16 %v392
  %v408 = vpack.c.b16 %v405, %v404
  %v409 = vpack.c.b16 %v407, %v406
  %vm412 = vcmask 261120
  %v414 = vsel %vm412, %v381, 0
  %v417 = vsel %vm412, %v382, 0
  %v420 = vsel %vm412, %v383, 0
  %v423 = vsel %vm412, %v384, 0
  %v426 = vsel %vm412, %v385, 0
  %v429 = vsel %vm412, %v386, 0
  %v432 = vsel %vm412, %v387, 0
  %v435 = vsel %vm412, %v388, 0
  %437 = vmatprep.subr.bf16.mxu0 0
  %438 = vmatpush1.bf16.msra.mxu0 %v408
  %439 = vmatprep.subr.bf16.mxu0 0
  %440 = vmatpush1.bf16.msra.mxu0 %v409
  %441 = vmatprep.subr.bf16.mxu0 0
  %442 = vmatpush1.bf16.msra.mxu0 0
  %443 = vmatprep.subr.bf16.mxu0 0
  %444 = vmatpush1.bf16.msra.mxu0 0
  %445 = vmatprep.subr.bf16.mxu0 0
  %446 = vmatpush1.bf16.msra.mxu0 0
  %447 = vmatprep.subr.bf16.mxu0 0
  %448 = vmatpush1.bf16.msra.mxu0 0
  %449 = vmatprep.subr.bf16.mxu0 0
  %450 = vmatpush1.bf16.msra.mxu0 0
  %451 = vmatprep.subr.bf16.mxu0 0
  %452 = vmatpush1.bf16.msra.mxu0 0
  %453 = vmatprep.subr.bf16.mxu0 0
  %454 = vmatpush1.bf16.msra.mxu0 0
  %455 = vmatprep.subr.bf16.mxu0 0
  %456 = vmatpush1.bf16.msra.mxu0 0
  %457 = vmatprep.subr.bf16.mxu0 0
  %458 = vmatpush1.bf16.msra.mxu0 0
  %459 = vmatprep.subr.bf16.mxu0 0
  %460 = vmatpush1.bf16.msra.mxu0 0
  %461 = vmatprep.subr.bf16.mxu0 0
  %462 = vmatpush1.bf16.msra.mxu0 0
  %463 = vmatprep.subr.bf16.mxu0 0
  %464 = vmatpush1.bf16.msra.mxu0 0
  %465 = vmatprep.subr.bf16.mxu0 0
  %466 = vmatpush1.bf16.msra.mxu0 0
  %467 = vmatprep.subr.bf16.mxu0 0
  %468 = vmatpush1.bf16.msra.mxu0 0
  %469 = vmatprep.mubr.bf16.mxu0 0
  %470 = vmatmul.mubr.bf16.gmra.mrb[0].mxu0 %v414
  %v471 = vpop.f32.mrb[0].mxu0
  %v472 = vadd.f32 %v398, %v471
  %v473 = vpop.f32.mrb[0].mxu0
  %v474 = vpop.f32.mrb[0].mxu0
  %v475 = vadd.f32 %v398, %v474
  %v476 = vpop.f32.mrb[0].mxu0
  %477 = vmatprep.mubr.bf16.mxu0 0
  %478 = vmatmul.mubr.bf16.gmra.mrb[0].mxu0 %v417
  %v479 = vpop.f32.mrb[0].mxu0
  %v480 = vadd.f32 %v398, %v479
  %v481 = vpop.f32.mrb[0].mxu0
  %v482 = vpop.f32.mrb[0].mxu0
  %v483 = vadd.f32 %v398, %v482
  %v484 = vpop.f32.mrb[0].mxu0
  %485 = vmatprep.mubr.bf16.mxu0 0
  %486 = vmatmul.mubr.bf16.gmra.mrb[0].mxu0 %v420
  %v487 = vpop.f32.mrb[0].mxu0
  %v488 = vadd.f32 %v398, %v487
  %v489 = vpop.f32.mrb[0].mxu0
  %v490 = vpop.f32.mrb[0].mxu0
  %v491 = vadd.f32 %v398, %v490
  %v492 = vpop.f32.mrb[0].mxu0
  %493 = vmatprep.mubr.bf16.mxu0 0
  %494 = vmatmul.mubr.bf16.gmra.mrb[0].mxu0 %v423
  %v495 = vpop.f32.mrb[0].mxu0
  %v496 = vadd.f32 %v398, %v495
  %v497 = vpop.f32.mrb[0].mxu0
  %v498 = vpop.f32.mrb[0].mxu0
  %v499 = vadd.f32 %v398, %v498
  %v500 = vpop.f32.mrb[0].mxu0
  %501 = vmatprep.mubr.bf16.mxu0 0
  %502 = vmatmul.mubr.bf16.gmra.mrb[0].mxu0 %v426
  %v503 = vpop.f32.mrb[0].mxu0
  %v504 = vadd.f32 %v398, %v503
  %v505 = vpop.f32.mrb[0].mxu0
  %v506 = vpop.f32.mrb[0].mxu0
  %v507 = vadd.f32 %v398, %v506
  %v508 = vpop.f32.mrb[0].mxu0
  %509 = vmatprep.mubr.bf16.mxu0 0
  %510 = vmatmul.mubr.bf16.gmra.mrb[0].mxu0 %v429
  %v511 = vpop.f32.mrb[0].mxu0
  %v512 = vadd.f32 %v398, %v511
  %v513 = vpop.f32.mrb[0].mxu0
  %v514 = vpop.f32.mrb[0].mxu0
  %v515 = vadd.f32 %v398, %v514
  %v516 = vpop.f32.mrb[0].mxu0
  %517 = vmatprep.mubr.bf16.mxu0 0
  %518 = vmatmul.mubr.bf16.gmra.mrb[0].mxu0 %v432
  %v519 = vpop.f32.mrb[0].mxu0
  %v520 = vadd.f32 %v398, %v519
  %v521 = vpop.f32.mrb[0].mxu0
  %v522 = vpop.f32.mrb[0].mxu0
  %v523 = vadd.f32 %v398, %v522
  %v524 = vpop.f32.mrb[0].mxu0
  %525 = vmatprep.mubr.bf16.mxu0 0
  %526 = vmatmul.mubr.bf16.gmra.mrb[0].mxu0 %v435
  %v527 = vpop.f32.mrb[0].mxu0
  %v528 = vadd.f32 %v398, %v527
  %v529 = vpop.f32.mrb[0].mxu0
  %v530 = vpop.f32.mrb[0].mxu0
  %v531 = vadd.f32 %v398, %v530
  %v532 = vpop.f32.mrb[0].mxu0
  %533 = vdwg.mxu0
  %v534 = vtanh.pop %v472
  %v535 = vtanh.pop %v475
  %v536 = vtanh.pop %v480
  %v537 = vtanh.pop %v483
  %v538 = vtanh.pop %v488
  %v539 = vtanh.pop %v491
  %v540 = vtanh.pop %v496
  %v541 = vtanh.pop %v499
  %v542 = vtanh.pop %v504
  %v543 = vtanh.pop %v507
  %v544 = vtanh.pop %v512
  %v545 = vtanh.pop %v515
  %v546 = vtanh.pop %v520
  %v547 = vtanh.pop %v523
  %v548 = vtanh.pop %v528
  %v549 = vtanh.pop %v531
  %v550 = vpack.c.bf16 %v535, %v534
  %v551 = vpack.c.bf16 %v537, %v536
  %v552 = vpack.c.bf16 %v539, %v538
  %v553 = vpack.c.bf16 %v541, %v540
  %v554 = vpack.c.bf16 %v543, %v542
  %v555 = vpack.c.bf16 %v545, %v544
  %v556 = vpack.c.bf16 %v547, %v546
  %v557 = vpack.c.bf16 %v549, %v548
  %v558 = vld [vmem:[%s7] sm:$0x1]
  %s559 = sld [smem:[#allocation2]]
  %v560 = vstv %s559
  %v562 = vsel %vm412, %v558, 0
  %v565 = vsel %vm412, %v550, 0
  %v568 = vsel %vm412, %v551, 0
  %v571 = vsel %vm412, %v552, 0
  %v574 = vsel %vm412, %v553, 0
  %v577 = vsel %vm412, %v554, 0
  %v580 = vsel %vm412, %v555, 0
  %v583 = vsel %vm412, %v556, 0
  %v586 = vsel %vm412, %v557, 0
  %588 = vmatprep.subr.bf16.mxu0 0
  %589 = vmatpush1.bf16.xpose.msra.mxu0 %v565
  %590 = vmatprep.subr.bf16.mxu0 0
  %591 = vmatpush1.bf16.xpose.msra.mxu0 %v568
  %592 = vmatprep.subr.bf16.mxu0 0
  %593 = vmatpush1.bf16.xpose.msra.mxu0 %v571
  %594 = vmatprep.subr.bf16.mxu0 0
  %595 = vmatpush1.bf16.xpose.msra.mxu0 %v574
  %596 = vmatprep.subr.bf16.mxu0 0
  %597 = vmatpush1.bf16.xpose.msra.mxu0 %v577
  %598 = vmatprep.subr.bf16.mxu0 0
  %599 = vmatpush1.bf16.xpose.msra.mxu0 %v580
  %600 = vmatprep.subr.bf16.mxu0 0
  %601 = vmatpush1.bf16.xpose.msra.mxu0 %v583
  %602 = vmatprep.subr.bf16.mxu0 0
  %603 = vmatpush1.bf16.xpose.msra.mxu0 %v586
  %604 = vmatprep.subr.bf16.mxu0 0
  %605 = vmatpush1.bf16.xpose.msra.mxu0 0
  %606 = vmatprep.subr.bf16.mxu0 0
  %607 = vmatpush1.bf16.xpose.msra.mxu0 0
  %608 = vmatprep.subr.bf16.mxu0 0
  %609 = vmatpush1.bf16.xpose.msra.mxu0 0
  %610 = vmatprep.subr.bf16.mxu0 0
  %611 = vmatpush1.bf16.xpose.msra.mxu0 0
  %612 = vmatprep.subr.bf16.mxu0 0
  %613 = vmatpush1.bf16.xpose.msra.mxu0 0
  %614 = vmatprep.subr.bf16.mxu0 0
  %615 = vmatpush1.bf16.xpose.msra.mxu0 0
  %616 = vmatprep.subr.bf16.mxu0 0
  %617 = vmatpush1.bf16.xpose.msra.mxu0 0
  %618 = vmatprep.subr.bf16.mxu0 0
  %619 = vmatpush1.bf16.xpose.msra.mxu0 0
  %620 = vmatprep.mubr.bf16.mxu0 0
  %621 = vmatmul.mubr.bf16.gmra.mrb[0].mxu0 %v562
  %v622 = vpop.f32.mrb[0].mxu0
  %v623 = vadd.f32 %v560, %v622
  %v624 = vpop.f32.mrb[0].mxu0
  %v625 = vpop.f32.mrb[0].mxu0
  %v626 = vpop.f32.mrb[0].mxu0
  %627 = vdwg.mxu0
  %628 = vst [vmem:[%s9] sm:$0x1] %v623
  // Predicated region
  $region38: #{_dqn_forward_impl.1} parent=0 // pred_check
    _
  $region39: #{_dqn_forward_impl.1} parent=0 // pred_check_branch
    %630 = sbr.rel (0) target = $region41
  $region40: #{_dqn_forward_impl.1} parent=0 // pred_region
    _
  $region41: #{_dqn_forward_impl.1} parent=0 // pred_fallthru
    _
  // Predicated region
  $region42: #{_dqn_forward_impl.1} parent=0 // pred_check
    _
  $region43: #{_dqn_forward_impl.1} parent=0 // pred_check_branch
    %632 = sbr.rel (0) target = $region45
  $region44: #{_dqn_forward_impl.1} parent=0 // pred_region
    _
  $region45: #{_dqn_forward_impl.1} parent=0 // pred_fallthru
    _

</llo_original>
